<compile_context>
chip_gen: v7x
topology: tpu7x:2x2x1
jax: 0.10.0
libtpu: 0.0.40
codegen_flags: <defaults>
</compile_context>

<pallas_src>
import functools
import math

import jax
import jax.numpy as jnp
from jax.experimental import pallas as pl
from jax.experimental.pallas import tpu as pltpu


def _round_up(v, m):
    return -(-v // m) * m


# --------------------------------------------------------------------------
# Kernels
# --------------------------------------------------------------------------
def _hidden_layer_kernel_inplace(x_ref, w_ref, b_ref, o_ref, *, compute_dtype):
    """f32 output: accumulate directly into the resident output block."""
    k = pl.program_id(2)

    @pl.when(k == 0)
    def _init():
        # Fold the bias into the accumulator init (one broadcast per tile).
        o_ref[...] = jnp.broadcast_to(b_ref[...].astype(o_ref.dtype), o_ref.shape)

    x = x_ref[...].astype(compute_dtype)
    w = w_ref[...].astype(compute_dtype)
    # x @ w.T on the MXU (w is stored (N, K); contract the K axes directly).
    o_ref[...] += jax.lax.dot_general(
        x, w, (((1,), (1,)), ((), ())), preferred_element_type=jnp.float32
    )

    @pl.when(k == pl.num_programs(2) - 1)
    def _finalize():
        o_ref[...] = jnp.maximum(o_ref[...], 0.0)


def _hidden_layer_kernel_scratch(x_ref, w_ref, b_ref, o_ref, acc_ref, *, compute_dtype):
    """Non-f32 output: accumulate in an f32 VMEM scratch, cast in the epilogue."""
    k = pl.program_id(2)

    @pl.when(k == 0)
    def _init():
        acc_ref[...] = jnp.broadcast_to(b_ref[...].astype(jnp.float32), acc_ref.shape)

    acc_ref[...] += jax.lax.dot_general(
        x_ref[...].astype(compute_dtype),
        w_ref[...].astype(compute_dtype),
        (((1,), (1,)), ((), ())),
        preferred_element_type=jnp.float32,
    )

    @pl.when(k == pl.num_programs(2) - 1)
    def _finalize():
        o_ref[...] = jnp.maximum(acc_ref[...], 0.0).astype(o_ref.dtype)


# --------------------------------------------------------------------------
# Tile / VMEM sizing helpers
# --------------------------------------------------------------------------
def _vmem_budget():
    """Generation-aware VMEM budget (bytes): ~3/4 of per-core physical VMEM."""
    cap = None
    try:
        info = pltpu.get_tpu_info()
        for name in ("vmem_capacity_bytes", "vmem_bytes", "vmem_size_bytes"):
            cap = getattr(info, name, None)
            if cap:
                break
    except Exception:
        cap = None
    if not cap:
        cap = 64 * 1024 * 1024  # conservative fallback: v7x per-TensorCore VMEM
    return int(cap) * 3 // 4     # 96 MiB on v5e/v6e (128 MiB), 48 MiB on v7x (64 MiB)


def _vmem_footprint(tm, tn, tk, x_bytes, w_bytes, out_bytes):
    return (
        2 * tm * tk * x_bytes            # x tiles, double-buffered
        + 2 * tn * tk * w_bytes          # w tiles, double-buffered
        + 2 * 8 * max(tn, 128) * 4       # bias tiles (sublane/lane padded)
        + 2 * tm * tn * out_bytes        # output tiles, double-buffered
        + (tm * tn * 4 if out_bytes != 4 else 0)  # f32 scratch accumulator (non-f32 out)
    )


def _select_tiles(B, K, N, x_bytes, w_bytes, out_bytes, budget,
                  tm_req=None, tn_req=None, tk_req=None):
    Kp = _round_up(K, 128)
    tm = _round_up(min(tm_req or 512, _round_up(B, 8)), 8)
    tn = _round_up(min(tn_req or 512, _round_up(N, 128)), 128)
    tk = _round_up(min(tk_req or Kp, Kp), 128)  # default: full K -> one reduction step

    while _vmem_footprint(tm, tn, tk, x_bytes, w_bytes, out_bytes) > budget:
        if tk > 512:              # more K steps, but keep M/N intensity high
            tk = _round_up(tk // 2, 128)
        elif tn > 256:
            tn = _round_up(max(tn // 2, 256), 128)
        elif tm > 128:
            tm = _round_up(max(tm // 2, 128), 8)
        elif tk > 128:
            tk = _round_up(tk // 2, 128)
        else:
            break                 # minimum tiles; footprint is tiny anyway
    return tm, tn, tk


def _split_for_megacore(B, N, tm, tn):
    """Expose >= 2 tiles on the 'parallel' axes when possible (v7x has 2 TCs)."""
    nb = _round_up(B, tm) // tm
    nn = _round_up(N, tn) // tn
    if nb * nn == 1:
        if B >= 16 and tm >= 16:
            tm = _round_up(-(-B // 2), 8)
        elif N >= 256 and tn >= 256:
            tn = _round_up(-(-N // 2), 128)
    return tm, tn


# --------------------------------------------------------------------------
# Public wrapper
# --------------------------------------------------------------------------
def hidden_layer(x, w, b, *, compute_dtype=jnp.bfloat16,
                 tm=None, tn=None, tk=None, vmem_limit_bytes=None):
    """relu(x @ w.T + b) — Pallas TPU kernel.

    x: (B, K)   w: (N, K)   b: (N,)  ->  (B, N) in x.dtype.
    compute_dtype=jnp.bfloat16 (default) uses the MXU bf16 path with f32
    accumulation; pass jnp.float32 for full-precision parity with nn.Linear.
    Tiles are sized automatically against the per-generation VMEM budget.
    """
    B, K = x.shape
    N, K2 = w.shape
    assert K == K2 and b.shape == (N,)
    out_dtype = x.dtype
    out_bytes = jnp.dtype(out_dtype).itemsize

    budget = _vmem_budget() if vmem_limit_bytes is None else int(vmem_limit_bytes)
    # Size tiles against the dtypes actually streamed from HBM (worst case:
    # un-cast f32 operands), with headroom under the compiler VMEM limit.
    x_bytes = jnp.dtype(x.dtype).itemsize
    w_bytes = jnp.dtype(w.dtype).itemsize
    tm_e, tn_e, tk_e = _select_tiles(
        B, K, N, x_bytes, w_bytes, out_bytes, int(budget * 0.85), tm, tn, tk
    )
    tm_e, tn_e = _split_for_megacore(B, N, tm_e, tn_e)

    Bp = _round_up(B, tm_e)
    Np = _round_up(N, tn_e)
    Kp = _round_up(K, tk_e)
    nb, nn, nk = Bp // tm_e, Np // tn_e, Kp // tk_e

    # Pre-cast to the compute dtype only when the grid re-streams the operand
    # enough times to amortize the extra wrapper-side HBM pass; otherwise the
    # cast happens in-kernel on the tile.
    x_streams = nn                     # x block (i, k): re-read once per N tile
    w_streams = 1 if nk == 1 else nb   # w block (j, k): constant over i when nk == 1
    x_in = x.astype(compute_dtype) if (x.dtype != compute_dtype and x_streams >= 3) else x
    w_in = w.astype(compute_dtype) if (w.dtype != compute_dtype and w_streams >= 3) else w
    b2 = b.reshape(1, N).astype(jnp.float32)

    # Zero-pad to tile multiples (padded K contributes 0; padded B/N sliced off).
    if (Bp, Kp) != (B, K):
        x_in = jnp.pad(x_in, ((0, Bp - B), (0, Kp - K)))
    if (Np, Kp) != (N, K):
        w_in = jnp.pad(w_in, ((0, Np - N), (0, Kp - K)))
    if Np != N:
        b2 = jnp.pad(b2, ((0, 0), (0, Np - N)))

    if out_dtype == jnp.float32:
        kernel = functools.partial(_hidden_layer_kernel_inplace, compute_dtype=compute_dtype)
        scratch_shapes = []
    else:
        kernel = functools.partial(_hidden_layer_kernel_scratch, compute_dtype=compute_dtype)
        scratch_shapes = [pltpu.VMEM((tm_e, tn_e), jnp.float32)]

    cost = pl.CostEstimate(
        flops=2 * Bp * Kp * Np,
        transcendentals=0,
        bytes_accessed=(
            x_in.size * jnp.dtype(x_in.dtype).itemsize * x_streams
            + w_in.size * jnp.dtype(w_in.dtype).itemsize * w_streams
            + b2.size * 4
            + Bp * Np * out_bytes
        ),
    )

    # Grid: (N tiles, batch tiles, K tiles) — reduction axis last.  With the
    # default full-K tk this is (nn, nb, 1) and the weight slab is fetched
    # exactly once per N tile.
    # TODO(synk): if a profile ever shows exposed DMA with nk > 1, add
    # pipeline_mode=pl.Buffered(3) to the x/w specs (needs the extra buffer
    # folded into the VMEM footprint check).
    out_padded = pl.pallas_call(
        kernel,
        out_shape=jax.ShapeDtypeStruct((Bp, Np), out_dtype),
        grid=(nn, nb, nk),
        in_specs=[
            pl.BlockSpec((tm_e, tk_e), lambda j, i, k: (i, k)),  # x tile
            pl.BlockSpec((tn_e, tk_e), lambda j, i, k: (j, k)),  # w tile (N, K): no wrapper transpose
            pl.BlockSpec((1, tn_e), lambda j, i, k: (0, j)),     # bias tile
        ],
        out_specs=pl.BlockSpec((tm_e, tn_e), lambda j, i, k: (i, j)),
        scratch_shapes=scratch_shapes,
        compiler_params=pltpu.CompilerParams(
            dimension_semantics=("parallel", "parallel", "arbitrary"),
            vmem_limit_bytes=int(budget),
        ),
        cost_estimate=cost,
    )(x_in, w_in, b2)

    if (Bp, Np) != (B, N):
        out_padded = out_padded[:B, :N]
    return out_padded


if __name__ == "__main__":
    # Small, deterministic example consistent with HiddenLayer(input_size, output_size).
    input_size = 32
    output_size = 64
    batch = 8

    key = jax.random.PRNGKey(0)
    kx, kw, kb = jax.random.split(key, 3)

    x = jax.random.normal(kx, (batch, input_size), dtype=jnp.float32)

    # nn.Linear default init: U(-1/sqrt(in), 1/sqrt(in)); W is (out, in), b is (out,).
    bound = 1.0 / math.sqrt(input_size)
    w = jax.random.uniform(kw, (output_size, input_size), jnp.float32, -bound, bound)
    b = jax.random.uniform(kb, (output_size,), jnp.float32, -bound, bound)

    out = jax.block_until_ready(hidden_layer(x, w, b))

    # Reference with the same bf16 operand cast / f32 accumulation as the kernel.
    ref = jnp.maximum(
        jnp.dot(x.astype(jnp.bfloat16), w.astype(jnp.bfloat16).T,
                preferred_element_type=jnp.float32) + b,
        0.0,
    )

    assert out.shape == (batch, output_size)
    assert out.dtype == x.dtype
    assert jnp.allclose(out, ref, atol=1e-3, rtol=1e-3), float(jnp.max(jnp.abs(out - ref)))

    # Also exercise the scratch/epilogue path (non-f32 output dtype).
    out_bf = jax.block_until_ready(hidden_layer(x.astype(jnp.bfloat16), w, b))
    assert out_bf.shape == (batch, output_size) and out_bf.dtype == jnp.bfloat16
    assert jnp.allclose(out_bf.astype(jnp.float32), ref, atol=3e-2, rtol=3e-2)

    print("KERNEL_OK")
</pallas_src>

<mosaic_0001>
module attributes {stable_mosaic.version = 11 : i64} {
  func.func @_hidden_layer_kernel_inplace(%arg0: i32, %arg1: i32, %arg2: i32, %arg3: memref<8x128xf32, #tpu.memory_space<vmem>>, %arg4: memref<128x128xf32, #tpu.memory_space<vmem>>, %arg5: memref<1x128xf32, #tpu.memory_space<vmem>>, %arg6: memref<8x128xf32, #tpu.memory_space<vmem>>) attributes {dimension_semantics = [#tpu.dimension_semantics<parallel>, #tpu.dimension_semantics<parallel>, #tpu.dimension_semantics<arbitrary>], iteration_bounds = array<i64: 1, 1, 1>, scalar_prefetch = 0 : i64, scratch_operands = 0 : i64, tpu.core_type = #tpu.core_type<tc>, window_params = [{transform_indices = @transform_0, window_bounds = array<i64: 8, 128>}, {transform_indices = @transform_1, window_bounds = array<i64: 128, 128>}, {transform_indices = @transform_2, window_bounds = array<i64: 1, 128>}, {transform_indices = @transform_3, window_bounds = array<i64: 8, 128>}]} {
    %c0_i32 = arith.constant 0 : i32
    %0 = arith.cmpi eq, %arg2, %c0_i32 : i32
    %1 = arith.extui %0 : i1 to i32
    %c0_i32_0 = arith.constant 0 : i32
    %2 = arith.cmpi ne, %1, %c0_i32_0 : i32
    scf.if %2 {
      %c0_10 = arith.constant 0 : index
      %c0_11 = arith.constant 0 : index
      %14 = vector.load %arg5[%c0_10, %c0_11] : memref<1x128xf32, #tpu.memory_space<vmem>>, vector<1x128xf32>
      %15 = vector.shape_cast %14 : vector<1x128xf32> to vector<1x128xf32>
      %16 = vector.broadcast %15 : vector<1x128xf32> to vector<8x128xf32>
      %c0_12 = arith.constant 0 : index
      %c0_13 = arith.constant 0 : index
      %17 = vector.load %arg6[%c0_12, %c0_13] : memref<8x128xf32, #tpu.memory_space<vmem>>, vector<8x128xf32>
      tpu.vector_store %arg6[%c0_12, %c0_13], %16 {strides = array<i32>} : memref<8x128xf32, #tpu.memory_space<vmem>>, vector<8x128xf32>,
    } else {
    }
    %c0 = arith.constant 0 : index
    %c0_1 = arith.constant 0 : index
    %3 = vector.load %arg3[%c0, %c0_1] : memref<8x128xf32, #tpu.memory_space<vmem>>, vector<8x128xf32>
    %4 = arith.truncf %3 : vector<8x128xf32> to vector<8x128xbf16>
    %c0_2 = arith.constant 0 : index
    %c0_3 = arith.constant 0 : index
    %5 = vector.load %arg4[%c0_2, %c0_3] : memref<128x128xf32, #tpu.memory_space<vmem>>, vector<128x128xf32>
    %6 = arith.truncf %5 : vector<128x128xf32> to vector<128x128xbf16>
    %c0_4 = arith.constant 0 : index
    %c0_5 = arith.constant 0 : index
    %7 = vector.load %arg6[%c0_4, %c0_5] : memref<8x128xf32, #tpu.memory_space<vmem>>, vector<8x128xf32>
    %cst = arith.constant dense<0.000000e+00> : vector<8x128xf32>
    %8 = tpu.matmul %4, %6, %cst {dimension_numbers = #tpu.dot_dimension_numbers<[1], [1], [0], [0], [0, 0, 1, 0], [], []>} : vector<8x128xbf16>, vector<128x128xbf16>, vector<8x128xf32> -> vector<8x128xf32>
    %9 = arith.addf %7, %8 : vector<8x128xf32>
    %c0_6 = arith.constant 0 : index
    %c0_7 = arith.constant 0 : index
    %10 = vector.load %arg6[%c0_6, %c0_7] : memref<8x128xf32, #tpu.memory_space<vmem>>, vector<8x128xf32>
    tpu.vector_store %arg6[%c0_6, %c0_7], %9 {strides = array<i32>} : memref<8x128xf32, #tpu.memory_space<vmem>>, vector<8x128xf32>,
    %c0_i32_8 = arith.constant 0 : i32
    %11 = arith.cmpi eq, %arg2, %c0_i32_8 : i32
    %12 = arith.extui %11 : i1 to i32
    %c0_i32_9 = arith.constant 0 : i32
    %13 = arith.cmpi ne, %12, %c0_i32_9 : i32
    scf.if %13 {
      %c0_10 = arith.constant 0 : index
      %c0_11 = arith.constant 0 : index
      %14 = vector.load %arg6[%c0_10, %c0_11] : memref<8x128xf32, #tpu.memory_space<vmem>>, vector<8x128xf32>
      %cst_12 = arith.constant 0.000000e+00 : f32
      %15 = vector.broadcast %cst_12 : f32 to vector<8x128xf32>
      %16 = arith.maximumf %14, %15 : vector<8x128xf32>
      %c0_13 = arith.constant 0 : index
      %c0_14 = arith.constant 0 : index
      %17 = vector.load %arg6[%c0_13, %c0_14] : memref<8x128xf32, #tpu.memory_space<vmem>>, vector<8x128xf32>
      tpu.vector_store %arg6[%c0_13, %c0_14], %16 {strides = array<i32>} : memref<8x128xf32, #tpu.memory_space<vmem>>, vector<8x128xf32>,
    } else {
    }
    return
  }
  func.func @transform_0(%arg0: i32, %arg1: i32, %arg2: i32) -> (i32, i32) {
    %c0_i32 = arith.constant 0 : i32
    return %arg1, %arg2 : i32, i32
  }
  func.func @transform_1(%arg0: i32, %arg1: i32, %arg2: i32) -> (i32, i32) {
    %c0_i32 = arith.constant 0 : i32
    return %arg0, %arg2 : i32, i32
  }
  func.func @transform_2(%arg0: i32, %arg1: i32, %arg2: i32) -> (i32, i32) {
    %c0_i32 = arith.constant 0 : i32
    %c0_i32_0 = arith.constant 0 : i32
    return %c0_i32, %arg0 : i32, i32
  }
  func.func @transform_3(%arg0: i32, %arg1: i32, %arg2: i32) -> (i32, i32) {
    %c0_i32 = arith.constant 0 : i32
    return %arg1, %arg0 : i32, i32
  }
}

</mosaic_0001>

<llo_original>
// kernel: tpu_custom_call.1
$region0: #{tpu_custom_call.1}
  #allocation0 [shape = 'u32[]', space=smem, size = 0x4, offset = 0x4, fixed_abs, tag = 'smem constant byte address 0x4 - core index']
  #allocation1 [shape = 'u32[144,128]{1,0:T(1,128)}', space=vmem, size = 0x12000, scoped, tag = 'internal scratch']
  %s0 = inlined_call_operand.hbm [shape: f32[8,128], index: 0, kind: input, shape index: {}]
  %s1 = inlined_call_operand.hbm [shape: f32[128,128], index: 1, kind: input, shape index: {}]
  %s2 = inlined_call_operand.vmem [shape: f32[1,128], index: 2, kind: input, shape index: {}]
  %s3 = inlined_call_operand.hbm [shape: f32[8,128], index: 3, kind: output, shape index: {}]
  %s4 = sld [smem:[#allocation0]]
  $region38: #{tpu_custom_call.1} parent=0
    _
  %s6 = ssub.s32 1, %s4
  %s7 = scalar_select 0, %s6, %s4
  $region1: #{tpu_custom_call.1} parent=0
    #allocation2 [shape = 'u8[4096]{0}', space=vmem, size = 0x1000, scoped, tag = 'input window, operand 0, single buffered']
    #allocation3 [shape = 's32[1]{0}', space=sflag, size = 0x4, scoped, tag = 'scoped memory for tpu_custom_call.1']
    #allocation4 [shape = 's32[1]{0}', space=sflag, size = 0x4, scoped, tag = 'scoped memory for tpu_custom_call.1']
    #allocation5 [shape = 'u8[65536]{0}', space=vmem, size = 0x10000, scoped, tag = 'input window, operand 1, single buffered']
    #allocation6 [shape = 's32[1]{0}', space=sflag, size = 0x4, scoped, tag = 'scoped memory for tpu_custom_call.1']
    #allocation7 [shape = 'u8[4096]{0}', space=vmem, size = 0x1000, scoped, tag = 'output window, operand 0, single buffered']
    %8 = vsyncpa [#allocation3], 0
    %9 = vsyncpa [#allocation6], 0
    %10 = vsyncpa [#allocation4], 0
    // Predicated region
    $region2: #{tpu_custom_call.1} parent=1 // pred_check
      _
    $region3: #{tpu_custom_call.1} parent=1 // pred_check_branch
      %12 = sbr.rel (0) target = $region5
    $region4: #{tpu_custom_call.1} parent=1 // pred_region
      %s14 = ssub.s32 128, 128
      %15 = vsyncadd [#allocation3], %s14
      %s17 = sshll.u32 [#allocation2], 4
      %s18 = int_to_ptr.vmem [resolvable:$true] %s17
      %20 = dma.hbm_to_vmem [thread:$0]  %s0, 128, %s18, [#allocation3]
    $region5: #{tpu_custom_call.1} parent=1 // pred_fallthru
      _
    // Predicated region
    $region6: #{tpu_custom_call.1} parent=1 // pred_check
      _
    $region7: #{tpu_custom_call.1} parent=1 // pred_check_branch
      %22 = sbr.rel (0) target = $region9
    $region8: #{tpu_custom_call.1} parent=1 // pred_region
      %s24 = ssub.s32 2048, 2048
      %25 = vsyncadd [#allocation6], %s24
      %s26 = sshll.u32 [#allocation5], 4
      %s27 = int_to_ptr.vmem [resolvable:$true] %s26
      %32 = dma.hbm_to_vmem [thread:$0]  %s1, 2048, %s27, [#allocation6], 128, 128, 8
    $region9: #{tpu_custom_call.1} parent=1 // pred_fallthru
      _
    // Predicated region
    $region10: #{tpu_custom_call.1} parent=1 // pred_check
      _
    $region11: #{tpu_custom_call.1} parent=1 // pred_check_branch
      %34 = sbr.rel (0) target = $region13
    $region12: #{tpu_custom_call.1} parent=1 // pred_region
      _
    $region13: #{tpu_custom_call.1} parent=1 // pred_fallthru
      _
    // Predicated region
    $region14: #{tpu_custom_call.1} parent=1 // pred_check
      _
    $region15: #{tpu_custom_call.1} parent=1 // pred_check_branch
      %36 = sbr.rel (0) target = $region17
    $region16: #{tpu_custom_call.1} parent=1 // pred_region
      %37 = dma.done [#allocation3], 128
    $region17: #{tpu_custom_call.1} parent=1 // pred_fallthru
      _
    // Predicated region
    $region18: #{tpu_custom_call.1} parent=1 // pred_check
      _
    $region19: #{tpu_custom_call.1} parent=1 // pred_check_branch
      %39 = sbr.rel (0) target = $region21
    $region20: #{tpu_custom_call.1} parent=1 // pred_region
      %40 = dma.done [#allocation6], 2048
    $region21: #{tpu_custom_call.1} parent=1 // pred_fallthru
      _
    %p42 = scmp.eq.s32.totalorder 0, 0
    // Predicated region
    $region22: #{tpu_custom_call.1} parent=1 // pred_check
      %p43 = pneg %p42
    $region23: #{tpu_custom_call.1} parent=1 // pred_check_branch
      %45 = sbr.rel (%p43) target = $region25
    $region24: #{tpu_custom_call.1} parent=1 // pred_region
      %v46 = vld [vmem:[%s2] sm:$0x1]
      %v48 = vlaneseq
      %v49 = vshrl.u32 %v48, 7
      %v50 = vsub.s32 0, %v49
      %v51 = vrot.slane %v46, %v50
      %53 = vst [vmem:[#allocation7] sm:$0xff] %v51
    $region25: #{tpu_custom_call.1} parent=1 // pred_fallthru
      _
    %v54 = vld [vmem:[#allocation2] sm:$0xff]
    %v55 = vpack.c.bf16 %v54, %v54
    %v56 = vld [vmem:[#allocation5] sm:$0xff]
    %v57 = vld [vmem:[#allocation5 + $0x8] sm:$0xff]
    %v58 = vld [vmem:[#allocation5 + $0x10] sm:$0xff]
    %v59 = vld [vmem:[#allocation5 + $0x18] sm:$0xff]
    %v60 = vld [vmem:[#allocation5 + $0x20] sm:$0xff]
    %v61 = vld [vmem:[#allocation5 + $0x28] sm:$0xff]
    %v62 = vld [vmem:[#allocation5 + $0x30] sm:$0xff]
    %v63 = vld [vmem:[#allocation5 + $0x38] sm:$0xff]
    %v64 = vld [vmem:[#allocation5 + $0x40] sm:$0xff]
    %v65 = vld [vmem:[#allocation5 + $0x48] sm:$0xff]
    %v66 = vld [vmem:[#allocation5 + $0x50] sm:$0xff]
    %v67 = vld [vmem:[#allocation5 + $0x58] sm:$0xff]
    %v68 = vld [vmem:[#allocation5 + $0x60] sm:$0xff]
    %v69 = vld [vmem:[#allocation5 + $0x68] sm:$0xff]
    %v70 = vld [vmem:[#allocation5 + $0x70] sm:$0xff]
    %v71 = vld [vmem:[#allocation5 + $0x78] sm:$0xff]
    %v72 = vpack.c.bf16 %v57, %v56
    %v73 = vpack.c.bf16 %v59, %v58
    %v74 = vpack.c.bf16 %v61, %v60
    %v75 = vpack.c.bf16 %v63, %v62
    %v76 = vpack.c.bf16 %v65, %v64
    %v77 = vpack.c.bf16 %v67, %v66
    %v78 = vpack.c.bf16 %v69, %v68
    %v79 = vpack.c.bf16 %v71, %v70
    %v80 = vld [vmem:[#allocation7] sm:$0xff]
    %81 = vmatprep.subr.bf16.mxu0 0
    %82 = vmatpush1.bf16.xpose.msra.mxu0 %v72
    %83 = vmatprep.subr.bf16.mxu0 0
    %84 = vmatpush1.bf16.xpose.msra.mxu0 %v73
    %85 = vmatprep.subr.bf16.mxu0 0
    %86 = vmatpush1.bf16.xpose.msra.mxu0 %v74
    %87 = vmatprep.subr.bf16.mxu0 0
    %88 = vmatpush1.bf16.xpose.msra.mxu0 %v75
    %89 = vmatprep.subr.bf16.mxu0 0
    %90 = vmatpush1.bf16.xpose.msra.mxu0 %v76
    %91 = vmatprep.subr.bf16.mxu0 0
    %92 = vmatpush1.bf16.xpose.msra.mxu0 %v77
    %93 = vmatprep.subr.bf16.mxu0 0
    %94 = vmatpush1.bf16.xpose.msra.mxu0 %v78
    %95 = vmatprep.subr.bf16.mxu0 0
    %96 = vmatpush1.bf16.xpose.msra.mxu0 %v79
    %97 = vmatprep.subr.bf16.mxu0 0
    %98 = vmatpush1.bf16.xpose.msra.mxu0 0
    %99 = vmatprep.subr.bf16.mxu0 0
    %100 = vmatpush1.bf16.xpose.msra.mxu0 0
    %101 = vmatprep.subr.bf16.mxu0 0
    %102 = vmatpush1.bf16.xpose.msra.mxu0 0
    %103 = vmatprep.subr.bf16.mxu0 0
    %104 = vmatpush1.bf16.xpose.msra.mxu0 0
    %105 = vmatprep.subr.bf16.mxu0 0
    %106 = vmatpush1.bf16.xpose.msra.mxu0 0
    %107 = vmatprep.subr.bf16.mxu0 0
    %108 = vmatpush1.bf16.xpose.msra.mxu0 0
    %109 = vmatprep.subr.bf16.mxu0 0
    %110 = vmatpush1.bf16.xpose.msra.mxu0 0
    %111 = vmatprep.subr.bf16.mxu0 0
    %112 = vmatpush1.bf16.xpose.msra.mxu0 0
    %113 = vmatprep.mubr.bf16.mxu0 0
    %114 = vmatmul.mubr.bf16.gmra.mrb[0].mxu0 %v55
    %v115 = vpop.f32.mrb[0].mxu0
    %v116 = vadd.f32 0.0, %v115
    %v117 = vpop.f32.mrb[0].mxu0
    %v118 = vpop.f32.mrb[0].mxu0
    %v119 = vpop.f32.mrb[0].mxu0
    %120 = vdwg.mxu0
    %v121 = vadd.f32 %v80, %v116
    %122 = vst [vmem:[#allocation7] sm:$0xff] %v121
    // Predicated region
    $region26: #{tpu_custom_call.1} parent=1 // pred_check
      %p123 = pneg %p42
    $region27: #{tpu_custom_call.1} parent=1 // pred_check_branch
      %125 = sbr.rel (%p123) target = $region29
    $region28: #{tpu_custom_call.1} parent=1 // pred_region
      %v126 = vld [vmem:[#allocation7] sm:$0xff]
      %v127 = vmax.f32 %v126, 0.0
      %128 = vst [vmem:[#allocation7] sm:$0xff] %v127
    $region29: #{tpu_custom_call.1} parent=1 // pred_fallthru
      _
    // Predicated region
    $region30: #{tpu_custom_call.1} parent=1 // pred_check
      _
    $region31: #{tpu_custom_call.1} parent=1 // pred_check_branch
      %130 = sbr.rel (0) target = $region33
    $region32: #{tpu_custom_call.1} parent=1 // pred_region
      %s132 = ssub.s32 128, 128
      %133 = vsyncadd [#allocation4], %s132
      %s135 = sshll.u32 [#allocation7], 4
      %s136 = int_to_ptr.vmem [resolvable:$true] %s135
      %138 = dma.vmem_to_hbm [thread:$0]  %s136, 128, %s3, [#allocation4]
    $region33: #{tpu_custom_call.1} parent=1 // pred_fallthru
      _
    // Predicated region
    $region34: #{tpu_custom_call.1} parent=1 // pred_check
      _
    $region35: #{tpu_custom_call.1} parent=1 // pred_check_branch
      %140 = sbr.rel (0) target = $region37
    $region36: #{tpu_custom_call.1} parent=1 // pred_region
      %141 = dma.done [#allocation4], 128
    $region37: #{tpu_custom_call.1} parent=1 // pred_fallthru
      _
    %142 = vsyncpa [#allocation3], 1
    %143 = vsyncpa [#allocation6], 1
    %144 = vsyncpa [#allocation4], 1

</llo_original>
